<compile_context>
chip_gen: v7x
topology: tpu7x:2x2x1
jax: 0.10.0
libtpu: 0.0.40
codegen_flags: <defaults>
</compile_context>

<pallas_src>
from functools import partial

import jax
import jax.numpy as jnp
import numpy as np
from jax.experimental import pallas as pl
from jax.experimental.pallas import tpu as pltpu


def _dwconv_kernel(x_ref, top_ref, bot_ref, w_ref, b_ref, o_ref, xp_ref, *, TH, W):
    # x_ref:   (1, TH, W, C)   current row tile
    # top_ref: (1, 1, W, C)    row just above the tile (clamped at the border)
    # bot_ref: (1, 1, W, C)    row just below the tile (clamped at the border)
    # w_ref:   (3, 3, C)       depthwise weights, channel-last
    # b_ref:   (1, C)          bias
    # o_ref:   (1, TH, W, C)   output row tile
    # xp_ref:  (TH+2, W+2, C)  f32 VMEM scratch: zero-padded input tile
    f32 = jnp.float32
    C = x_ref.shape[-1]

    i = pl.program_id(1)
    n_i = pl.num_programs(1)

    w = w_ref[...].astype(f32)                      # (3, 3, C)
    bias = b_ref[0].astype(f32)                     # (C,)

    # Mask the vertical halo rows at the top/bottom of the image (SAME padding).
    top_ok = (i > 0).astype(f32)
    bot_ok = (i < n_i - 1).astype(f32)
    top = top_ref[0, 0].astype(f32) * top_ok        # (W, C)
    bot = bot_ref[0, 0].astype(f32) * bot_ok        # (W, C)

    # Assemble the zero-padded (TH+2, W+2, C) tile in VMEM scratch.  This
    # replaces the wrapper-side jnp.pad (which doubled input HBM traffic).
    zcol = jnp.zeros((TH + 2, 1, C), f32)
    xp_ref[:, 0:1, :] = zcol                        # left zero column
    xp_ref[:, W + 1:W + 2, :] = zcol                # right zero column
    xp_ref[0:1, 1:W + 1, :] = top[None]             # row above the tile
    xp_ref[TH + 1:TH + 2, 1:W + 1, :] = bot[None]   # row below the tile
    xp_ref[1:TH + 1, 1:W + 1, :] = x_ref[0].astype(f32)

    xp = xp_ref[...]                                # (TH+2, W+2, C) f32

    # 3x3 depthwise conv = 9 shifted multiply-accumulates on the VPU, over a
    # small per-tile f32 accumulator (not a whole-image one).
    acc = jnp.zeros((TH, W, C), f32)
    for kh in range(3):
        for kw in range(3):
            acc = acc + xp[kh:kh + TH, kw:kw + W, :] * w[kh, kw]

    o_ref[0] = (acc + bias).astype(o_ref.dtype)


def _pick_row_tile(H, W, C):
    """Largest divisor of H whose f32 working tile stays around <=512 KiB."""
    row_bytes_f32 = W * C * 4
    want = max(8, (512 * 1024) // max(row_bytes_f32, 1))
    best = 1
    for d in range(1, H + 1):
        if H % d == 0 and d <= want:
            best = d
    return best


def dwconv(x, weight, bias, H, W, *, row_tile=None):
    """Pallas equivalent of DWConv.forward(x, H, W).

    x:      (B, N, C) with N == H * W  (f32 or bf16; storage dtype preserved)
    weight: (C, 1, 3, 3)  PyTorch depthwise Conv2d weight layout
    bias:   (C,)
    returns (B, N, C)
    """
    B, N, C = x.shape
    assert N == H * W, "N must equal H*W"

    # Free, contiguous reshape (no pad, no transpose, no extra HBM copy).
    x_img = x.reshape(B, H, W, C)
    w_hwc = jnp.transpose(weight[:, 0, :, :], (1, 2, 0))   # (3, 3, C)
    b_2d = bias.reshape(1, C)

    TH = row_tile if row_tile is not None else _pick_row_tile(H, W, C)
    assert H % TH == 0, "row_tile must divide H"
    n_row_tiles = H // TH

    out = pl.pallas_call(
        partial(_dwconv_kernel, TH=TH, W=W),
        out_shape=jax.ShapeDtypeStruct((B, H, W, C), x.dtype),
        grid_spec=pltpu.PrefetchScalarGridSpec(
            num_scalar_prefetch=0,
            grid=(B, n_row_tiles),
            in_specs=[
                # current row tile
                pl.BlockSpec((1, TH, W, C), lambda b, i: (b, i, 0, 0)),
                # 1-row halo above (block size 1 along H -> block idx == row idx)
                pl.BlockSpec((1, 1, W, C),
                             lambda b, i: (b, jnp.maximum(i * TH - 1, 0), 0, 0)),
                # 1-row halo below
                pl.BlockSpec((1, 1, W, C),
                             lambda b, i: (b, jnp.minimum((i + 1) * TH, H - 1), 0, 0)),
                pl.BlockSpec((3, 3, C), lambda b, i: (0, 0, 0)),
                pl.BlockSpec((1, C), lambda b, i: (0, 0)),
            ],
            out_specs=pl.BlockSpec((1, TH, W, C), lambda b, i: (b, i, 0, 0)),
            scratch_shapes=[pltpu.VMEM((TH + 2, W + 2, C), jnp.float32)],
        ),
        compiler_params=pltpu.CompilerParams(
            dimension_semantics=("parallel", "parallel"),
            vmem_limit_bytes=48 * 1024 * 1024,
        ),
    )(x_img, x_img, x_img, w_hwc, b_2d)

    return out.reshape(B, N, C)


if __name__ == "__main__":
    # Small deterministic example consistent with the module's forward:
    # x: (B, N, C) with N = H * W
    B, H, W, C = 2, 16, 16, 32
    N = H * W

    key = jax.random.PRNGKey(0)
    kx, kw_, kb = jax.random.split(key, 3)
    x = jax.random.normal(kx, (B, N, C), dtype=jnp.float32)
    weight = jax.random.normal(kw_, (C, 1, 3, 3), dtype=jnp.float32) * 0.1
    bias = jax.random.normal(kb, (C,), dtype=jnp.float32) * 0.1

    # Reference: XLA grouped conv in NCHW, matching the PyTorch module.
    x_nchw = jnp.transpose(x.reshape(B, H, W, C), (0, 3, 1, 2))
    ref_nchw = jax.lax.conv_general_dilated(
        x_nchw, weight, window_strides=(1, 1), padding="SAME",
        feature_group_count=C,
        dimension_numbers=("NCHW", "OIHW", "NCHW"),
    ) + bias[None, :, None, None]
    ref = jnp.transpose(ref_nchw, (0, 2, 3, 1)).reshape(B, N, C)

    # row_tile=8 exercises the multi-tile path with in-kernel halo exchange;
    # row_tile=None exercises the auto-tiling heuristic.
    for rt in (8, None):
        out = jax.block_until_ready(dwconv(x, weight, bias, H, W, row_tile=rt))
        np.testing.assert_allclose(np.asarray(out), np.asarray(ref),
                                   rtol=1e-5, atol=1e-5)

    print("KERNEL_OK")
</pallas_src>

<mosaic_0001>
module attributes {stable_mosaic.version = 11 : i64} {
  func.func @_dwconv_kernel(%arg0: i32, %arg1: i32, %arg2: memref<1x8x16x32xf32, #tpu.memory_space<vmem>>, %arg3: memref<1x1x16x32xf32, #tpu.memory_space<vmem>>, %arg4: memref<1x1x16x32xf32, #tpu.memory_space<vmem>>, %arg5: memref<3x3x32xf32, #tpu.memory_space<vmem>>, %arg6: memref<1x32xf32, #tpu.memory_space<vmem>>, %arg7: memref<1x8x16x32xf32, #tpu.memory_space<vmem>>, %arg8: memref<10x18x32xf32, #tpu.memory_space<vmem>>) attributes {dimension_semantics = [#tpu.dimension_semantics<parallel>, #tpu.dimension_semantics<parallel>], iteration_bounds = array<i64: 2, 2>, scalar_prefetch = 0 : i64, scratch_operands = 1 : i64, tpu.core_type = #tpu.core_type<tc>, window_params = [{transform_indices = @transform_0, window_bounds = array<i64: 1, 8, 16, 32>}, {transform_indices = @transform_1, window_bounds = array<i64: 1, 1, 16, 32>}, {transform_indices = @transform_2, window_bounds = array<i64: 1, 1, 16, 32>}, {pipeline_mode = #tpu.pipeline_mode<synchronous>, transform_indices = @transform_3, window_bounds = array<i64: 3, 3, 32>}, {pipeline_mode = #tpu.pipeline_mode<synchronous>, transform_indices = @transform_4, window_bounds = array<i64: 1, 32>}, {transform_indices = @transform_5, window_bounds = array<i64: 1, 8, 16, 32>}]} {
    %c0 = arith.constant 0 : index
    %c0_0 = arith.constant 0 : index
    %c0_1 = arith.constant 0 : index
    %0 = vector.load %arg5[%c0, %c0_0, %c0_1] : memref<3x3x32xf32, #tpu.memory_space<vmem>>, vector<3x3x32xf32>
    %c0_2 = arith.constant 0 : index
    %c0_3 = arith.constant 0 : index
    %1 = vector.load %arg6[%c0_2, %c0_3] : memref<1x32xf32, #tpu.memory_space<vmem>>, vector<1x32xf32>
    %2 = vector.shape_cast %1 : vector<1x32xf32> to vector<32xf32>
    %c0_i32 = arith.constant 0 : i32
    %3 = arith.cmpi sgt, %arg1, %c0_i32 : i32
    %4 = arith.extui %3 : i1 to i32
    %5 = arith.sitofp %4 : i32 to f32
    %c1_i32 = arith.constant 1 : i32
    %6 = arith.cmpi slt, %arg1, %c1_i32 : i32
    %7 = arith.extui %6 : i1 to i32
    %8 = arith.sitofp %7 : i32 to f32
    %c0_4 = arith.constant 0 : index
    %c0_5 = arith.constant 0 : index
    %c0_6 = arith.constant 0 : index
    %c0_7 = arith.constant 0 : index
    %9 = vector.load %arg3[%c0_4, %c0_5, %c0_6, %c0_7] : memref<1x1x16x32xf32, #tpu.memory_space<vmem>>, vector<1x1x16x32xf32>
    %10 = vector.shape_cast %9 : vector<1x1x16x32xf32> to vector<16x32xf32>
    %11 = vector.broadcast %5 : f32 to vector<16x32xf32>
    %12 = arith.mulf %10, %11 : vector<16x32xf32>
    %c0_8 = arith.constant 0 : index
    %c0_9 = arith.constant 0 : index
    %c0_10 = arith.constant 0 : index
    %c0_11 = arith.constant 0 : index
    %13 = vector.load %arg4[%c0_8, %c0_9, %c0_10, %c0_11] : memref<1x1x16x32xf32, #tpu.memory_space<vmem>>, vector<1x1x16x32xf32>
    %14 = vector.shape_cast %13 : vector<1x1x16x32xf32> to vector<16x32xf32>
    %15 = vector.broadcast %8 : f32 to vector<16x32xf32>
    %16 = arith.mulf %14, %15 : vector<16x32xf32>
    %cst = arith.constant 0.000000e+00 : f32
    %17 = vector.broadcast %cst : f32 to vector<10x1x32xf32>
    %c0_12 = arith.constant 0 : index
    %c0_13 = arith.constant 0 : index
    %c0_14 = arith.constant 0 : index
    %18 = vector.load %arg8[%c0_12, %c0_13, %c0_14] : memref<10x18x32xf32, #tpu.memory_space<vmem>>, vector<10x1x32xf32>
    tpu.vector_store %arg8[%c0_12, %c0_13, %c0_14], %17 {strides = array<i32>} : memref<10x18x32xf32, #tpu.memory_space<vmem>>, vector<10x1x32xf32>,
    %c0_15 = arith.constant 0 : index
    %c17 = arith.constant 17 : index
    %c0_16 = arith.constant 0 : index
    %19 = vector.load %arg8[%c0_15, %c17, %c0_16] : memref<10x18x32xf32, #tpu.memory_space<vmem>>, vector<10x1x32xf32>
    tpu.vector_store %arg8[%c0_15, %c17, %c0_16], %17 {strides = array<i32>} : memref<10x18x32xf32, #tpu.memory_space<vmem>>, vector<10x1x32xf32>,
    %20 = vector.shape_cast %12 : vector<16x32xf32> to vector<1x16x32xf32>
    %c0_17 = arith.constant 0 : index
    %c1 = arith.constant 1 : index
    %c0_18 = arith.constant 0 : index
    %21 = vector.load %arg8[%c0_17, %c1, %c0_18] : memref<10x18x32xf32, #tpu.memory_space<vmem>>, vector<1x16x32xf32>
    tpu.vector_store %arg8[%c0_17, %c1, %c0_18], %20 {strides = array<i32>} : memref<10x18x32xf32, #tpu.memory_space<vmem>>, vector<1x16x32xf32>,
    %22 = vector.shape_cast %16 : vector<16x32xf32> to vector<1x16x32xf32>
    %c9 = arith.constant 9 : index
    %c1_19 = arith.constant 1 : index
    %c0_20 = arith.constant 0 : index
    %23 = vector.load %arg8[%c9, %c1_19, %c0_20] : memref<10x18x32xf32, #tpu.memory_space<vmem>>, vector<1x16x32xf32>
    tpu.vector_store %arg8[%c9, %c1_19, %c0_20], %22 {strides = array<i32>} : memref<10x18x32xf32, #tpu.memory_space<vmem>>, vector<1x16x32xf32>,
    %c0_21 = arith.constant 0 : index
    %c0_22 = arith.constant 0 : index
    %c0_23 = arith.constant 0 : index
    %c0_24 = arith.constant 0 : index
    %24 = vector.load %arg2[%c0_21, %c0_22, %c0_23, %c0_24] : memref<1x8x16x32xf32, #tpu.memory_space<vmem>>, vector<1x8x16x32xf32>
    %25 = vector.shape_cast %24 : vector<1x8x16x32xf32> to vector<8x16x32xf32>
    %c1_25 = arith.constant 1 : index
    %c1_26 = arith.constant 1 : index
    %c0_27 = arith.constant 0 : index
    %26 = vector.load %arg8[%c1_25, %c1_26, %c0_27] : memref<10x18x32xf32, #tpu.memory_space<vmem>>, vector<8x16x32xf32>
    tpu.vector_store %arg8[%c1_25, %c1_26, %c0_27], %25 {strides = array<i32>} : memref<10x18x32xf32, #tpu.memory_space<vmem>>, vector<8x16x32xf32>,
    %c0_28 = arith.constant 0 : index
    %c0_29 = arith.constant 0 : index
    %c0_30 = arith.constant 0 : index
    %27 = vector.load %arg8[%c0_28, %c0_29, %c0_30] : memref<10x18x32xf32, #tpu.memory_space<vmem>>, vector<10x18x32xf32>
    %cst_31 = arith.constant 0.000000e+00 : f32
    %28 = vector.broadcast %cst_31 : f32 to vector<8x16x32xf32>
    %29 = vector.extract_strided_slice %27 {offsets = [0, 0, 0], sizes = [8, 16, 32], strides = [1, 1, 1]} : vector<10x18x32xf32> to vector<8x16x32xf32>
    %30 = vector.extract_strided_slice %0 {offsets = [0, 0, 0], sizes = [1, 1, 32], strides = [1, 1, 1]} : vector<3x3x32xf32> to vector<1x1x32xf32>
    %31 = vector.shape_cast %30 : vector<1x1x32xf32> to vector<32xf32>
    %32 = vector.shape_cast %31 : vector<32xf32> to vector<1x1x32xf32>
    %33 = vector.broadcast %32 : vector<1x1x32xf32> to vector<8x16x32xf32>
    %34 = arith.mulf %29, %33 : vector<8x16x32xf32>
    %35 = arith.addf %28, %34 : vector<8x16x32xf32>
    %36 = vector.extract_strided_slice %27 {offsets = [0, 1, 0], sizes = [8, 16, 32], strides = [1, 1, 1]} : vector<10x18x32xf32> to vector<8x16x32xf32>
    %37 = vector.extract_strided_slice %0 {offsets = [0, 1, 0], sizes = [1, 1, 32], strides = [1, 1, 1]} : vector<3x3x32xf32> to vector<1x1x32xf32>
    %38 = vector.shape_cast %37 : vector<1x1x32xf32> to vector<32xf32>
    %39 = vector.shape_cast %38 : vector<32xf32> to vector<1x1x32xf32>
    %40 = vector.broadcast %39 : vector<1x1x32xf32> to vector<8x16x32xf32>
    %41 = arith.mulf %36, %40 : vector<8x16x32xf32>
    %42 = arith.addf %35, %41 : vector<8x16x32xf32>
    %43 = vector.extract_strided_slice %27 {offsets = [0, 2, 0], sizes = [8, 16, 32], strides = [1, 1, 1]} : vector<10x18x32xf32> to vector<8x16x32xf32>
    %44 = vector.extract_strided_slice %0 {offsets = [0, 2, 0], sizes = [1, 1, 32], strides = [1, 1, 1]} : vector<3x3x32xf32> to vector<1x1x32xf32>
    %45 = vector.shape_cast %44 : vector<1x1x32xf32> to vector<32xf32>
    %46 = vector.shape_cast %45 : vector<32xf32> to vector<1x1x32xf32>
    %47 = vector.broadcast %46 : vector<1x1x32xf32> to vector<8x16x32xf32>
    %48 = arith.mulf %43, %47 : vector<8x16x32xf32>
    %49 = arith.addf %42, %48 : vector<8x16x32xf32>
    %50 = vector.extract_strided_slice %27 {offsets = [1, 0, 0], sizes = [8, 16, 32], strides = [1, 1, 1]} : vector<10x18x32xf32> to vector<8x16x32xf32>
    %51 = vector.extract_strided_slice %0 {offsets = [1, 0, 0], sizes = [1, 1, 32], strides = [1, 1, 1]} : vector<3x3x32xf32> to vector<1x1x32xf32>
    %52 = vector.shape_cast %51 : vector<1x1x32xf32> to vector<32xf32>
    %53 = vector.shape_cast %52 : vector<32xf32> to vector<1x1x32xf32>
    %54 = vector.broadcast %53 : vector<1x1x32xf32> to vector<8x16x32xf32>
    %55 = arith.mulf %50, %54 : vector<8x16x32xf32>
    %56 = arith.addf %49, %55 : vector<8x16x32xf32>
    %57 = vector.extract_strided_slice %27 {offsets = [1, 1, 0], sizes = [8, 16, 32], strides = [1, 1, 1]} : vector<10x18x32xf32> to vector<8x16x32xf32>
    %58 = vector.extract_strided_slice %0 {offsets = [1, 1, 0], sizes = [1, 1, 32], strides = [1, 1, 1]} : vector<3x3x32xf32> to vector<1x1x32xf32>
    %59 = vector.shape_cast %58 : vector<1x1x32xf32> to vector<32xf32>
    %60 = vector.shape_cast %59 : vector<32xf32> to vector<1x1x32xf32>
    %61 = vector.broadcast %60 : vector<1x1x32xf32> to vector<8x16x32xf32>
    %62 = arith.mulf %57, %61 : vector<8x16x32xf32>
    %63 = arith.addf %56, %62 : vector<8x16x32xf32>
    %64 = vector.extract_strided_slice %27 {offsets = [1, 2, 0], sizes = [8, 16, 32], strides = [1, 1, 1]} : vector<10x18x32xf32> to vector<8x16x32xf32>
    %65 = vector.extract_strided_slice %0 {offsets = [1, 2, 0], sizes = [1, 1, 32], strides = [1, 1, 1]} : vector<3x3x32xf32> to vector<1x1x32xf32>
    %66 = vector.shape_cast %65 : vector<1x1x32xf32> to vector<32xf32>
    %67 = vector.shape_cast %66 : vector<32xf32> to vector<1x1x32xf32>
    %68 = vector.broadcast %67 : vector<1x1x32xf32> to vector<8x16x32xf32>
    %69 = arith.mulf %64, %68 : vector<8x16x32xf32>
    %70 = arith.addf %63, %69 : vector<8x16x32xf32>
    %71 = vector.extract_strided_slice %27 {offsets = [2, 0, 0], sizes = [8, 16, 32], strides = [1, 1, 1]} : vector<10x18x32xf32> to vector<8x16x32xf32>
    %72 = vector.extract_strided_slice %0 {offsets = [2, 0, 0], sizes = [1, 1, 32], strides = [1, 1, 1]} : vector<3x3x32xf32> to vector<1x1x32xf32>
    %73 = vector.shape_cast %72 : vector<1x1x32xf32> to vector<32xf32>
    %74 = vector.shape_cast %73 : vector<32xf32> to vector<1x1x32xf32>
    %75 = vector.broadcast %74 : vector<1x1x32xf32> to vector<8x16x32xf32>
    %76 = arith.mulf %71, %75 : vector<8x16x32xf32>
    %77 = arith.addf %70, %76 : vector<8x16x32xf32>
    %78 = vector.extract_strided_slice %27 {offsets = [2, 1, 0], sizes = [8, 16, 32], strides = [1, 1, 1]} : vector<10x18x32xf32> to vector<8x16x32xf32>
    %79 = vector.extract_strided_slice %0 {offsets = [2, 1, 0], sizes = [1, 1, 32], strides = [1, 1, 1]} : vector<3x3x32xf32> to vector<1x1x32xf32>
    %80 = vector.shape_cast %79 : vector<1x1x32xf32> to vector<32xf32>
    %81 = vector.shape_cast %80 : vector<32xf32> to vector<1x1x32xf32>
    %82 = vector.broadcast %81 : vector<1x1x32xf32> to vector<8x16x32xf32>
    %83 = arith.mulf %78, %82 : vector<8x16x32xf32>
    %84 = arith.addf %77, %83 : vector<8x16x32xf32>
    %85 = vector.extract_strided_slice %27 {offsets = [2, 2, 0], sizes = [8, 16, 32], strides = [1, 1, 1]} : vector<10x18x32xf32> to vector<8x16x32xf32>
    %86 = vector.extract_strided_slice %0 {offsets = [2, 2, 0], sizes = [1, 1, 32], strides = [1, 1, 1]} : vector<3x3x32xf32> to vector<1x1x32xf32>
    %87 = vector.shape_cast %86 : vector<1x1x32xf32> to vector<32xf32>
    %88 = vector.shape_cast %87 : vector<32xf32> to vector<1x1x32xf32>
    %89 = vector.broadcast %88 : vector<1x1x32xf32> to vector<8x16x32xf32>
    %90 = arith.mulf %85, %89 : vector<8x16x32xf32>
    %91 = arith.addf %84, %90 : vector<8x16x32xf32>
    %92 = vector.shape_cast %2 : vector<32xf32> to vector<1x1x32xf32>
    %93 = vector.broadcast %92 : vector<1x1x32xf32> to vector<8x16x32xf32>
    %94 = arith.addf %91, %93 : vector<8x16x32xf32>
    %c0_32 = arith.constant 0 : index
    %c0_33 = arith.constant 0 : index
    %c0_34 = arith.constant 0 : index
    %c0_35 = arith.constant 0 : index
    %95 = vector.load %arg7[%c0_32, %c0_33, %c0_34, %c0_35] : memref<1x8x16x32xf32, #tpu.memory_space<vmem>>, vector<1x8x16x32xf32>
    %96 = vector.shape_cast %95 : vector<1x8x16x32xf32> to vector<8x16x32xf32>
    %97 = vector.shape_cast %94 : vector<8x16x32xf32> to vector<1x8x16x32xf32>
    tpu.vector_store %arg7[%c0_32, %c0_33, %c0_34, %c0_35], %97 {strides = array<i32>} : memref<1x8x16x32xf32, #tpu.memory_space<vmem>>, vector<1x8x16x32xf32>,
    return
  }
  func.func @transform_0(%arg0: i32, %arg1: i32) -> (i32, i32, i32, i32) {
    %c0_i32 = arith.constant 0 : i32
    %c0_i32_0 = arith.constant 0 : i32
    %c0_i32_1 = arith.constant 0 : i32
    return %arg0, %arg1, %c0_i32, %c0_i32_0 : i32, i32, i32, i32
  }
  func.func @transform_1(%arg0: i32, %arg1: i32) -> (i32, i32, i32, i32) {
    %c8_i32 = arith.constant 8 : i32
    %0 = arith.muli %arg1, %c8_i32 : i32
    %c1_i32 = arith.constant 1 : i32
    %1 = arith.subi %0, %c1_i32 : i32
    %c0_i32 = arith.constant 0 : i32
    %2 = arith.maxsi %1, %c0_i32 : i32
    %c0_i32_0 = arith.constant 0 : i32
    %c0_i32_1 = arith.constant 0 : i32
    %c0_i32_2 = arith.constant 0 : i32
    return %arg0, %2, %c0_i32_0, %c0_i32_1 : i32, i32, i32, i32
  }
  func.func @transform_2(%arg0: i32, %arg1: i32) -> (i32, i32, i32, i32) {
    %c1_i32 = arith.constant 1 : i32
    %0 = arith.addi %arg1, %c1_i32 : i32
    %c8_i32 = arith.constant 8 : i32
    %1 = arith.muli %0, %c8_i32 : i32
    %c15_i32 = arith.constant 15 : i32
    %2 = arith.minsi %1, %c15_i32 : i32
    %c0_i32 = arith.constant 0 : i32
    %c0_i32_0 = arith.constant 0 : i32
    %c0_i32_1 = arith.constant 0 : i32
    return %arg0, %2, %c0_i32, %c0_i32_0 : i32, i32, i32, i32
  }
  func.func @transform_3(%arg0: i32, %arg1: i32) -> (i32, i32, i32) {
    %c0_i32 = arith.constant 0 : i32
    %c0_i32_0 = arith.constant 0 : i32
    %c0_i32_1 = arith.constant 0 : i32
    %c0_i32_2 = arith.constant 0 : i32
    return %c0_i32, %c0_i32_0, %c0_i32_1 : i32, i32, i32
  }
  func.func @transform_4(%arg0: i32, %arg1: i32) -> (i32, i32) {
    %c0_i32 = arith.constant 0 : i32
    %c0_i32_0 = arith.constant 0 : i32
    %c0_i32_1 = arith.constant 0 : i32
    return %c0_i32, %c0_i32_0 : i32, i32
  }
  func.func @transform_5(%arg0: i32, %arg1: i32) -> (i32, i32, i32, i32) {
    %c0_i32 = arith.constant 0 : i32
    %c0_i32_0 = arith.constant 0 : i32
    %c0_i32_1 = arith.constant 0 : i32
    return %arg0, %arg1, %c0_i32, %c0_i32_0 : i32, i32, i32, i32
  }
}

</mosaic_0001>

<llo_original>
// kernel: tpu_custom_call.1
$region0: #{tpu_custom_call.1}
  #allocation0 [shape = 'u32[]', space=smem, size = 0x4, offset = 0x4, fixed_abs, tag = 'smem constant byte address 0x4 - core index']
  #allocation1 [shape = 'u32[144,128]{1,0:T(1,128)}', space=vmem, size = 0x12000, scoped, tag = 'internal scratch']
  #allocation2 [shape = 'f32[10,18,32]{2,1,0:T(8,128)}', space=vmem, size = 0x1e000, scoped, tag = 'scratch operand']
  %s0 = inlined_call_operand.hbm [shape: f32[2,16,16,32], index: 0, kind: input, shape index: {}]
  %s1 = inlined_call_operand.hbm [shape: f32[2,16,16,32], index: 1, kind: input, shape index: {}]
  %s2 = inlined_call_operand.hbm [shape: f32[2,16,16,32], index: 2, kind: input, shape index: {}]
  %s3 = inlined_call_operand.hbm [shape: f32[3,3,32], index: 3, kind: input, shape index: {}]
  %s4 = inlined_call_operand.vmem [shape: f32[1,32], index: 4, kind: input, shape index: {}]
  %s5 = inlined_call_operand.hbm [shape: f32[2,16,16,32], index: 5, kind: output, shape index: {}]
  %s6 = sld [smem:[#allocation0]]
  $region69: #{tpu_custom_call.1} parent=0
    _
  %s8 = ssub.s32 1, %s6
  %s9 = scalar_select 0, %s8, %s6
  $region1: #{tpu_custom_call.1} parent=0
    #allocation3 [shape = 'u8[131072]{0}', space=vmem, size = 0x20000, scoped, tag = 'input window, operand 0']
    #allocation4 [shape = 's32[2]{0}', space=sflag, size = 0x8, scoped, tag = 'scoped memory for tpu_custom_call.1']
    #allocation5 [shape = 's32[2]{0}', space=sflag, size = 0x8, scoped, tag = 'scoped memory for tpu_custom_call.1']
    #allocation6 [shape = 'u8[16384]{0}', space=vmem, size = 0x4000, scoped, tag = 'input window, operand 1']
    #allocation7 [shape = 's32[2]{0}', space=sflag, size = 0x8, scoped, tag = 'scoped memory for tpu_custom_call.1']
    #allocation8 [shape = 'u8[16384]{0}', space=vmem, size = 0x4000, scoped, tag = 'input window, operand 2']
    #allocation9 [shape = 'u8[6144]{0}', space=vmem, size = 0x1800, scoped, tag = 'input window, operand 3, single buffered']
    #allocation10 [shape = 's32[1]{0}', space=sflag, size = 0x4, scoped, tag = 'scoped memory for tpu_custom_call.1']
    #allocation11 [shape = 'u8[131072]{0}', space=vmem, size = 0x20000, scoped, tag = 'output window, operand 0']
    %10 = vsyncpa [#allocation4], 0
    %s11 = scalar_lea.sflag [#allocation4], 1
    %12 = vsyncpa %s11, 0
    %13 = vsyncpa [#allocation7], 0
    %s14 = scalar_lea.sflag [#allocation7], 1
    %15 = vsyncpa %s14, 0
    %16 = vsyncpa [#allocation10], 0
    %17 = vsyncpa [#allocation5], 0
    %s18 = scalar_lea.sflag [#allocation5], 1
    %19 = vsyncpa %s18, 0
    loop: start=0, step=1, limit=6
    $region2: #{tpu_custom_call.1} parent=1 // loop_pre_header
      _
    $region3: #{tpu_custom_call.1} parent=1 // loop_header
      %s21 = sphi 0, %s25
      %p22 = scmp.ge.s32.totalorder %s21, 6
      %s28 = sphi 0, %s40
      %s29 = sphi 0, %s36
      %s30 = sphi 0, %s28
      %s31 = sphi 0, %s29
      %s32 = sphi 0, %s30
      %s33 = sphi 0, %s31
      %s45 = sphi 0, %s47
      %s48 = sphi 0, %s45
      %s49 = sphi 0, %s48
      %s65 = sphi 0, %s49
      %s81 = sphi 0, %s83
      %s84 = sphi 0, %s81
      %s85 = sphi 0, %s84
      %s101 = sphi 0, %s85
      %s117 = sphi 0, %s119
      %s120 = sphi 0, %s117
      %s121 = sphi 0, %s120
      %s137 = sphi 0, %s121
      %s141 = sphi 0, %s141
      %s143 = sphi 0, %s141
      %s144 = sphi 0, %s143
      %s158 = sphi 0, %s144
      %s162 = sphi 0, %s162
      %s164 = sphi 0, %s162
      %s165 = sphi 0, %s164
      %s179 = sphi 0, %s165
      %s187 = sphi 0, %s189
      %s190 = sphi 0, %s187
      %s191 = sphi 0, %s190
      %s207 = sphi 0, %s191
    $region4: #{tpu_custom_call.1} parent=1 // loop_header_branch
      %24 = sbr.rel (%p22) target = $region8
    $region5: #{tpu_custom_call.1} parent=1 // loop_body
      %s26 = ssub.s32 %s21, 1
      %s27 = ssub.s32 %s21, 2
      %s34 = sadd.s32 1, %s29
      %p35 = scmp.ge.s32.totalorder %s34, 2
      %s36 = scalar_select %p35, 0, %s34
      %s37 = sadd.s32 1, %s28
      %s38 = scalar_select %p35, %s37, %s28
      %p39 = scmp.ge.s32.totalorder %s38, 2
      %s40 = scalar_select %p39, 0, %s38
      %s41 = ssub.s32 %s28, %s40
      %s42 = ssub.s32 %s29, %s36
      %s43 = sor.u32 %s41, %s42
      %p44 = scmp.eq.s32.totalorder %s43, 0
      %s46 = sadd.s32 %s45, 1
      %s47 = scalar_select %p44, %s45, %s46
      %p50 = pneg %p44
      %p51 = scmp.eq.s32.totalorder %s21, 3
      %p52 = por %p50, %p51
      %p53 = scmp.ne.s32.totalorder %s45, %s48
      %p54 = scmp.eq.s32.totalorder %s21, 0
      %p55 = por %p53, %p54
      %p56 = scmp.ne.s32.totalorder %s45, %s48
      %p57 = scmp.eq.s32.totalorder %s26, 3
      %p58 = por %p56, %p57
      %p59 = scmp.ne.s32.totalorder %s48, %s49
      %p60 = scmp.eq.s32.totalorder %s26, 0
      %p61 = por %p59, %p60
      %p62 = scmp.ne.s32.totalorder %s48, %s49
      %p63 = scmp.eq.s32.totalorder %s27, 3
      %p64 = por %p62, %p63
      %p66 = scmp.ne.s32.totalorder %s49, %s65
      %p67 = scmp.eq.s32.totalorder %s27, 0
      %p68 = por %p66, %p67
      %s69 = smul.u32 %s29, 8
      %s70 = ssub.s32 %s69, 1
      %p71 = scmp.gt.s32.totalorder %s70, 0
      %s72 = scalar_select %p71, %s70, 0
      %s73 = smul.u32 %s36, 8
      %s74 = ssub.s32 %s73, 1
      %p75 = scmp.gt.s32.totalorder %s74, 0
      %s76 = scalar_select %p75, %s74, 0
      %s77 = ssub.s32 %s28, %s40
      %s78 = ssub.s32 %s72, %s76
      %s79 = sor.u32 %s77, %s78
      %p80 = scmp.eq.s32.totalorder %s79, 0
      %s82 = sadd.s32 %s81, 1
      %s83 = scalar_select %p80, %s81, %s82
      %p86 = pneg %p80
      %p87 = scmp.eq.s32.totalorder %s21, 3
      %p88 = por %p86, %p87
      %p89 = scmp.ne.s32.totalorder %s81, %s84
      %p90 = scmp.eq.s32.totalorder %s21, 0
      %p91 = por %p89, %p90
      %p92 = scmp.ne.s32.totalorder %s81, %s84
      %p93 = scmp.eq.s32.totalorder %s26, 3
      %p94 = por %p92, %p93
      %p95 = scmp.ne.s32.totalorder %s84, %s85
      %p96 = scmp.eq.s32.totalorder %s26, 0
      %p97 = por %p95, %p96
      %p98 = scmp.ne.s32.totalorder %s84, %s85
      %p99 = scmp.eq.s32.totalorder %s27, 3
      %p100 = por %p98, %p99
      %p102 = scmp.ne.s32.totalorder %s85, %s101
      %p103 = scmp.eq.s32.totalorder %s27, 0
      %p104 = por %p102, %p103
      %s105 = sadd.s32 %s29, 1
      %s106 = smul.u32 %s105, 8
      %p107 = scmp.lt.s32.totalorder %s106, 15
      %s108 = scalar_select %p107, %s106, 15
      %s109 = sadd.s32 %s36, 1
      %s110 = smul.u32 %s109, 8
      %p111 = scmp.lt.s32.totalorder %s110, 15
      %s112 = scalar_select %p111, %s110, 15
      %s113 = ssub.s32 %s28, %s40
      %s114 = ssub.s32 %s108, %s112
      %s115 = sor.u32 %s113, %s114
      %p116 = scmp.eq.s32.totalorder %s115, 0
      %s118 = sadd.s32 %s117, 1
      %s119 = scalar_select %p116, %s117, %s118
      %p122 = pneg %p116
      %p123 = scmp.eq.s32.totalorder %s21, 3
      %p124 = por %p122, %p123
      %p125 = scmp.ne.s32.totalorder %s117, %s120
      %p126 = scmp.eq.s32.totalorder %s21, 0
      %p127 = por %p125, %p126
      %p128 = scmp.ne.s32.totalorder %s117, %s120
      %p129 = scmp.eq.s32.totalorder %s26, 3
      %p130 = por %p128, %p129
      %p131 = scmp.ne.s32.totalorder %s120, %s121
      %p132 = scmp.eq.s32.totalorder %s26, 0
      %p133 = por %p131, %p132
      %p134 = scmp.ne.s32.totalorder %s120, %s121
      %p135 = scmp.eq.s32.totalorder %s27, 3
      %p136 = por %p134, %p135
      %p138 = scmp.ne.s32.totalorder %s121, %s137
      %p139 = scmp.eq.s32.totalorder %s27, 0
      %p140 = por %p138, %p139
      %s142 = sadd.s32 %s141, 1
      %p145 = scmp.eq.s32.totalorder %s21, 3
      %p146 = scmp.ne.s32.totalorder %s141, %s143
      %p147 = scmp.eq.s32.totalorder %s21, 0
      %p148 = por %p146, %p147
      %p149 = scmp.ne.s32.totalorder %s141, %s143
      %p150 = scmp.eq.s32.totalorder %s26, 3
      %p151 = por %p149, %p150
      %p152 = scmp.ne.s32.totalorder %s143, %s144
      %p153 = scmp.eq.s32.totalorder %s26, 0
      %p154 = por %p152, %p153
      %p155 = scmp.ne.s32.totalorder %s143, %s144
      %p156 = scmp.eq.s32.totalorder %s27, 3
      %p157 = por %p155, %p156
      %p159 = scmp.ne.s32.totalorder %s144, %s158
      %p160 = scmp.eq.s32.totalorder %s27, 0
      %p161 = por %p159, %p160
      %s163 = sadd.s32 %s162, 1
      %p166 = scmp.eq.s32.totalorder %s21, 3
      %p167 = scmp.ne.s32.totalorder %s162, %s164
      %p168 = scmp.eq.s32.totalorder %s21, 0
      %p169 = por %p167, %p168
      %p170 = scmp.ne.s32.totalorder %s162, %s164
      %p171 = scmp.eq.s32.totalorder %s26, 3
      %p172 = por %p170, %p171
      %p173 = scmp.ne.s32.totalorder %s164, %s165
      %p174 = scmp.eq.s32.totalorder %s26, 0
      %p175 = por %p173, %p174
      %p176 = scmp.ne.s32.totalorder %s164, %s165
      %p177 = scmp.eq.s32.totalorder %s27, 3
      %p178 = por %p176, %p177
      %p180 = scmp.ne.s32.totalorder %s165, %s179
      %p181 = scmp.eq.s32.totalorder %s27, 0
      %p182 = por %p180, %p181
      %s183 = ssub.s32 %s28, %s40
      %s184 = ssub.s32 %s29, %s36
      %s185 = sor.u32 %s183, %s184
      %p186 = scmp.eq.s32.totalorder %s185, 0
      %s188 = sadd.s32 %s187, 1
      %s189 = scalar_select %p186, %s187, %s188
      %p192 = pneg %p186
      %p193 = scmp.eq.s32.totalorder %s21, 3
      %p194 = por %p192, %p193
      %p195 = scmp.ne.s32.totalorder %s187, %s190
      %p196 = scmp.eq.s32.totalorder %s21, 0
      %p197 = por %p195, %p196
      %p198 = scmp.ne.s32.totalorder %s187, %s190
      %p199 = scmp.eq.s32.totalorder %s26, 3
      %p200 = por %p198, %p199
      %p201 = scmp.ne.s32.totalorder %s190, %s191
      %p202 = scmp.eq.s32.totalorder %s26, 0
      %p203 = por %p201, %p202
      %p204 = scmp.ne.s32.totalorder %s190, %s191
      %p205 = scmp.eq.s32.totalorder %s27, 3
      %p206 = por %p204, %p205
      %p208 = scmp.ne.s32.totalorder %s191, %s207
      %p209 = scmp.eq.s32.totalorder %s27, 0
      %p210 = por %p208, %p209
      %p211 = scmp.le.s32.totalorder 1, %s21
      %p212 = scmp.lt.s32.totalorder %s21, 5
      %p213 = pnand %p211, %p212
      %p214 = pneg %p213
      // Predicated region
      $region9: #{tpu_custom_call.1} parent=5 // pred_check
        _
      $region10: #{tpu_custom_call.1} parent=5 // pred_check_branch
        %216 = sbr.rel (%p213) target = $region12
      $region11: #{tpu_custom_call.1} parent=5 // pred_region
        %s217 = ssub.s32 %s21, 1
        // Predicated region
        $region13: #{tpu_custom_call.1} parent=11 // pred_check
          %p218 = pneg %p154
        $region14: #{tpu_custom_call.1} parent=11 // pred_check_branch
          %220 = sbr.rel (%p218) target = $region16
        $region15: #{tpu_custom_call.1} parent=11 // pred_region
          %s222 = ssub.s32 192, 192
          %223 = vsyncadd [#allocation10], %s222
          %s224 = sshll.u32 [#allocation9], 4
          %s225 = int_to_ptr.vmem [resolvable:$true] %s224
          %230 = dma.hbm_to_vmem [thread:$0]  %s3, 192, %s225, [#allocation10], 64, 64, 4
        $region16: #{tpu_custom_call.1} parent=11 // pred_fallthru
          _
        // Predicated region
        $region17: #{tpu_custom_call.1} parent=11 // pred_check
          %p231 = pneg %p175
        $region18: #{tpu_custom_call.1} parent=11 // pred_check_branch
          %233 = sbr.rel (%p231) target = $region20
        $region19: #{tpu_custom_call.1} parent=11 // pred_region
          _
        $region20: #{tpu_custom_call.1} parent=11 // pred_fallthru
          _
      $region12: #{tpu_custom_call.1} parent=5 // pred_fallthru
        _
      %p234 = scmp.lt.s32.totalorder %s21, 4
      // Predicated region
      $region21: #{tpu_custom_call.1} parent=5 // pred_check
        %p235 = pneg %p234
      $region22: #{tpu_custom_call.1} parent=5 // pred_check_branch
        %237 = sbr.rel (%p235) target = $region24
      $region23: #{tpu_custom_call.1} parent=5 // pred_region
        // Predicated region
        $region25: #{tpu_custom_call.1} parent=23 // pred_check
          %p238 = pneg %p55
        $region26: #{tpu_custom_call.1} parent=23 // pred_check_branch
          %240 = sbr.rel (%p238) target = $region28
        $region27: #{tpu_custom_call.1} parent=23 // pred_region
          %s241 = sand.u32 %s45, 1
          %s242 = scalar_lea.sflag [#allocation4], %s241
          %s243 = sand.u32 %s45, 1
          %s244 = smul.addr %s243, 128
          %s245 = scalar_lea.vmem [#allocation3], %s244
          %s246 = smul.u32 8, %s29
          %s248 = ssub.s32 2048, 2048
          %249 = vsyncadd %s242, %s248
          %s250 = smul.addr %s246, 2
          %s251 = smul.addr %s28, 32
          %s252 = sadd.s32 %s250, %s251
          %s253 = smul.addr %s252, 128
          %s254 = scalar_lea.hbm %s0, %s253
          %s255 = sshll.u32 %s245, 4
          %s256 = int_to_ptr.vmem [resolvable:$true] %s255
          %261 = dma.hbm_to_vmem [thread:$0]  %s254, 2048, %s256, %s242, 128, 128, 8
        $region28: #{tpu_custom_call.1} parent=23 // pred_fallthru
          _
        // Predicated region
        $region29: #{tpu_custom_call.1} parent=23 // pred_check
          %p262 = pneg %p91
        $region30: #{tpu_custom_call.1} parent=23 // pred_check_branch
          %264 = sbr.rel (%p262) target = $region32
        $region31: #{tpu_custom_call.1} parent=23 // pred_region
          %s265 = sand.u32 %s21, 1
          %s266 = scalar_lea.sflag [#allocation7], %s265
          %s267 = sand.u32 %s81, 1
          %s268 = smul.addr %s267, 16
          %s269 = scalar_lea.vmem [#allocation6], %s268
          %s270 = smul.u32 %s29, 8
          %s271 = ssub.s32 %s270, 1
          %p272 = scmp.gt.s32.totalorder %s271, 0
          %s273 = scalar_select %p272, %s271, 0
          %s275 = ssub.s32 256, 256
          %276 = vsyncadd %s266, %s275
          %s277 = smul.addr %s273, 2
          %s278 = smul.addr %s28, 32
          %s279 = sadd.s32 %s277, %s278
          %s280 = smul.addr %s279, 128
          %s281 = scalar_lea.hbm %s1, %s280
          %s282 = sshll.u32 %s269, 4
          %s283 = int_to_ptr.vmem [resolvable:$true] %s282
          %288 = dma.hbm_to_vmem [thread:$0]  %s281, 256, %s283, %s266, 128, 128, 8
        $region32: #{tpu_custom_call.1} parent=23 // pred_fallthru
          _
        // Predicated region
        $region33: #{tpu_custom_call.1} parent=23 // pred_check
          %p289 = pneg %p127
        $region34: #{tpu_custom_call.1} parent=23 // pred_check_branch
          %291 = sbr.rel (%p289) target = $region36
        $region35: #{tpu_custom_call.1} parent=23 // pred_region
          %s292 = sand.u32 %s21, 1
          %s293 = scalar_lea.sflag [#allocation7], %s292
          %s294 = sand.u32 %s117, 1
          %s295 = smul.addr %s294, 16
          %s296 = scalar_lea.vmem [#allocation8], %s295
          %s297 = sadd.s32 %s29, 1
          %s298 = smul.u32 %s297, 8
          %p299 = scmp.lt.s32.totalorder %s298, 15
          %s300 = scalar_select %p299, %s298, 15
          %s302 = ssub.s32 256, 256
          %303 = vsyncadd %s293, %s302
          %s304 = smul.addr %s300, 2
          %s305 = smul.addr %s28, 32
          %s306 = sadd.s32 %s304, %s305
          %s307 = smul.addr %s306, 128
          %s308 = scalar_lea.hbm %s2, %s307
          %s309 = sshll.u32 %s296, 4
          %s310 = int_to_ptr.vmem [resolvable:$true] %s309
          %315 = dma.hbm_to_vmem [thread:$0]  %s308, 256, %s310, %s293, 128, 128, 8
        $region36: #{tpu_custom_call.1} parent=23 // pred_fallthru
          _
      $region24: #{tpu_custom_call.1} parent=5 // pred_fallthru
        _
      %p316 = scmp.le.s32.totalorder 1, %s21
      %p317 = scmp.lt.s32.totalorder %s21, 5
      %p318 = pnand %p316, %p317
      %p319 = pneg %p318
      // Predicated region
      $region37: #{tpu_custom_call.1} parent=5 // pred_check
        _
      $region38: #{tpu_custom_call.1} parent=5 // pred_check_branch
        %321 = sbr.rel (%p318) target = $region40
      $region39: #{tpu_custom_call.1} parent=5 // pred_region
        %s322 = ssub.s32 %s21, 1
        %s323 = sand.u32 %s48, 1
        %s324 = scalar_lea.sflag [#allocation4], %s323
        %s325 = sand.u32 %s48, 1
        %s326 = smul.addr %s325, 128
        %s327 = scalar_lea.vmem [#allocation3], %s326
        // Predicated region
        $region41: #{tpu_custom_call.1} parent=39 // pred_check
          %p328 = pneg %p61
        $region42: #{tpu_custom_call.1} parent=39 // pred_check_branch
          %330 = sbr.rel (%p328) target = $region44
        $region43: #{tpu_custom_call.1} parent=39 // pred_region
          %331 = dma.done %s324, 2048
        $region44: #{tpu_custom_call.1} parent=39 // pred_fallthru
          _
        %s332 = sand.u32 %s26, 1
        %s333 = scalar_lea.sflag [#allocation7], %s332
        %s334 = sand.u32 %s84, 1
        %s335 = smul.addr %s334, 16
        %s336 = scalar_lea.vmem [#allocation6], %s335
        // Predicated region
        $region45: #{tpu_custom_call.1} parent=39 // pred_check
          %p337 = pneg %p97
        $region46: #{tpu_custom_call.1} parent=39 // pred_check_branch
          %339 = sbr.rel (%p337) target = $region48
        $region47: #{tpu_custom_call.1} parent=39 // pred_region
          %340 = dma.done %s333, 256
        $region48: #{tpu_custom_call.1} parent=39 // pred_fallthru
          _
        %s341 = sand.u32 %s26, 1
        %s342 = scalar_lea.sflag [#allocation7], %s341
        %s343 = sand.u32 %s120, 1
        %s344 = smul.addr %s343, 16
        %s345 = scalar_lea.vmem [#allocation8], %s344
        // Predicated region
        $region49: #{tpu_custom_call.1} parent=39 // pred_check
          %p346 = pneg %p133
        $region50: #{tpu_custom_call.1} parent=39 // pred_check_branch
          %348 = sbr.rel (%p346) target = $region52
        $region51: #{tpu_custom_call.1} parent=39 // pred_region
          %349 = dma.done %s342, 256
        $region52: #{tpu_custom_call.1} parent=39 // pred_fallthru
          _
        // Predicated region
        $region53: #{tpu_custom_call.1} parent=39 // pred_check
          %p350 = pneg %p154
        $region54: #{tpu_custom_call.1} parent=39 // pred_check_branch
          %352 = sbr.rel (%p350) target = $region56
        $region55: #{tpu_custom_call.1} parent=39 // pred_region
          %353 = dma.done [#allocation10], 192
        $region56: #{tpu_custom_call.1} parent=39 // pred_fallthru
          _
        %s354 = sand.u32 %s48, 1
        %s355 = scalar_lea.sflag [#allocation4], %s354
        %s356 = sand.u32 %s48, 1
        %s357 = smul.addr %s356, 128
        %s358 = scalar_lea.vmem [#allocation3], %s357
        %p359 = pneg %p61
        %p360 = pneg %p58
        %s361 = sand.u32 %s26, 1
        %s362 = scalar_lea.sflag [#allocation7], %s361
        %s363 = sand.u32 %s84, 1
        %s364 = smul.addr %s363, 16
        %s365 = scalar_lea.vmem [#allocation6], %s364
        %p366 = pneg %p97
        %p367 = pneg %p94
        %s368 = sand.u32 %s26, 1
        %s369 = scalar_lea.sflag [#allocation7], %s368
        %s370 = sand.u32 %s120, 1
        %s371 = smul.addr %s370, 16
        %s372 = scalar_lea.vmem [#allocation8], %s371
        %p373 = pneg %p133
        %p374 = pneg %p130
        %p375 = pneg %p154
        %p376 = pneg %p151
        %p377 = pneg %p175
        %p378 = pneg %p172
        %p379 = pneg %p203
        %p380 = pneg %p200
        %s381 = sand.u32 %s190, 1
        %s382 = scalar_lea.sflag [#allocation5], %s381
        %s383 = sand.u32 %s190, 1
        %s384 = smul.addr %s383, 128
        %s385 = scalar_lea.vmem [#allocation11], %s384
        %s386 = smul.u32 8, %s31
        %s387 = smul.u32 %s31, 8
        %s388 = ssub.s32 %s387, 1
        %p389 = scmp.gt.s32.totalorder %s388, 0
        %s390 = scalar_select %p389, %s388, 0
        %s391 = sadd.s32 %s31, 1
        %s392 = smul.u32 %s391, 8
        %p393 = scmp.lt.s32.totalorder %s392, 15
        %s394 = scalar_select %p393, %s392, 15
        %s395 = smul.u32 8, %s31
        %v396 = vld [vmem:[#allocation9] sm:$0x7]
        %v397 = vld [vmem:[#allocation9 + $0x4] sm:$0x7]
        %v398 = vld [vmem:[#allocation9 + $0x8] sm:$0x7]
        %v399 = vld [vmem:[%s4] sm:$0x1]
        %p400 = scmp.gt.s32.totalorder %s31, 0
        %s401 = scalar_select %p400, 1, 0
        %s402 = scvt.s32.f32 %s401
        %p403 = scmp.lt.s32.totalorder %s31, 1
        %s404 = scalar_select %p403, 1, 0
        %s405 = scvt.s32.f32 %s404
        %v406 = vld [vmem:[%s336] sm:$0xff]
        %v407 = vld [vmem:[%s336 + $0x8] sm:$0xff]
        %v408 = vstv %s402
        %v409 = vmul.f32 %v406, %v408
        %v410 = vmul.f32 %v407, %v408
        %v411 = vld [vmem:[%s345] sm:$0xff]
        %v412 = vld [vmem:[%s345 + $0x8] sm:$0xff]
        %v413 = vstv %s405
        %v414 = vmul.f32 %v411, %v413
        %v415 = vmul.f32 %v412, %v413
        %vm416 = vcmask 253952
        %417 = vst.msk [vmem:[#allocation2] sm:$0x1] %vm416, 0.0
        %418 = vst.msk [vmem:[#allocation2 + $0x18] sm:$0x1] %vm416, 0.0
        %419 = vst.msk [vmem:[#allocation2 + $0x30] sm:$0x1] %vm416, 0.0
        %420 = vst.msk [vmem:[#allocation2 + $0x48] sm:$0x1] %vm416, 0.0
        %421 = vst.msk [vmem:[#allocation2 + $0x60] sm:$0x1] %vm416, 0.0
        %422 = vst.msk [vmem:[#allocation2 + $0x78] sm:$0x1] %vm416, 0.0
        %423 = vst.msk [vmem:[#allocation2 + $0x90] sm:$0x1] %vm416, 0.0
        %424 = vst.msk [vmem:[#allocation2 + $0xa8] sm:$0x1] %vm416, 0.0
        %425 = vst.msk [vmem:[#allocation2 + $0xc0] sm:$0x1] %vm416, 0.0
        %426 = vst.msk [vmem:[#allocation2 + $0xd8] sm:$0x1] %vm416, 0.0
        %427 = vst.msk [vmem:[#allocation2 + $0x11] sm:$0x1] %vm416, 0.0
        %428 = vst.msk [vmem:[#allocation2 + $0x29] sm:$0x1] %vm416, 0.0
        %429 = vst.msk [vmem:[#allocation2 + $0x41] sm:$0x1] %vm416, 0.0
        %430 = vst.msk [vmem:[#allocation2 + $0x59] sm:$0x1] %vm416, 0.0
        %431 = vst.msk [vmem:[#allocation2 + $0x71] sm:$0x1] %vm416, 0.0
        %432 = vst.msk [vmem:[#allocation2 + $0x89] sm:$0x1] %vm416, 0.0
        %433 = vst.msk [vmem:[#allocation2 + $0xa1] sm:$0x1] %vm416, 0.0
        %434 = vst.msk [vmem:[#allocation2 + $0xb9] sm:$0x1] %vm416, 0.0
        %435 = vst.msk [vmem:[#allocation2 + $0xd1] sm:$0x1] %vm416, 0.0
        %436 = vst.msk [vmem:[#allocation2 + $0xe9] sm:$0x1] %vm416, 0.0
        %vm437 = vcmask 261120
        %438 = vst.msk [vmem:[#allocation2 + $0x1] sm:$0xff] %vm437, %v409
        %439 = vst.msk [vmem:[#allocation2 + $0x9] sm:$0xff] %vm437, %v410
        %s440 = scalar_lea.vmem [#allocation2], 216
        %441 = vst.msk [vmem:[%s440 + $0x1] sm:$0xff] %vm437, %v414
        %442 = vst.msk [vmem:[%s440 + $0x9] sm:$0xff] %vm437, %v415
        %v443 = vld [vmem:[%s327] sm:$0xff]
        %v444 = vld [vmem:[%s327 + $0x8] sm:$0xff]
        %v445 = vld [vmem:[%s327 + $0x10] sm:$0xff]
        %v446 = vld [vmem:[%s327 + $0x18] sm:$0xff]
        %v447 = vld [vmem:[%s327 + $0x20] sm:$0xff]
        %v448 = vld [vmem:[%s327 + $0x28] sm:$0xff]
        %v449 = vld [vmem:[%s327 + $0x30] sm:$0xff]
        %v450 = vld [vmem:[%s327 + $0x38] sm:$0xff]
        %v451 = vld [vmem:[%s327 + $0x40] sm:$0xff]
        %v452 = vld [vmem:[%s327 + $0x48] sm:$0xff]
        %v453 = vld [vmem:[%s327 + $0x50] sm:$0xff]
        %v454 = vld [vmem:[%s327 + $0x58] sm:$0xff]
        %v455 = vld [vmem:[%s327 + $0x60] sm:$0xff]
        %v456 = vld [vmem:[%s327 + $0x68] sm:$0xff]
        %v457 = vld [vmem:[%s327 + $0x70] sm:$0xff]
        %v458 = vld [vmem:[%s327 + $0x78] sm:$0xff]
        %s459 = scalar_lea.vmem [#allocation2], 24
        %460 = vst.msk [vmem:[%s459 + $0x1] sm:$0xff] %vm437, %v443
        %461 = vst.msk [vmem:[%s459 + $0x9] sm:$0xff] %vm437, %v444
        %462 = vst.msk [vmem:[%s459 + $0x19] sm:$0xff] %vm437, %v445
        %463 = vst.msk [vmem:[%s459 + $0x21] sm:$0xff] %vm437, %v446
        %464 = vst.msk [vmem:[%s459 + $0x31] sm:$0xff] %vm437, %v447
        %465 = vst.msk [vmem:[%s459 + $0x39] sm:$0xff] %vm437, %v448
        %466 = vst.msk [vmem:[%s459 + $0x49] sm:$0xff] %vm437, %v449
        %467 = vst.msk [vmem:[%s459 + $0x51] sm:$0xff] %vm437, %v450
        %468 = vst.msk [vmem:[%s459 + $0x61] sm:$0xff] %vm437, %v451
        %469 = vst.msk [vmem:[%s459 + $0x69] sm:$0xff] %vm437, %v452
        %470 = vst.msk [vmem:[%s459 + $0x79] sm:$0xff] %vm437, %v453
        %471 = vst.msk [vmem:[%s459 + $0x81] sm:$0xff] %vm437, %v454
        %472 = vst.msk [vmem:[%s459 + $0x91] sm:$0xff] %vm437, %v455
        %473 = vst.msk [vmem:[%s459 + $0x99] sm:$0xff] %vm437, %v456
        %474 = vst.msk [vmem:[%s459 + $0xa9] sm:$0xff] %vm437, %v457
        %475 = vst.msk [vmem:[%s459 + $0xb1] sm:$0xff] %vm437, %v458
        %v476 = vld [vmem:[#allocation2] sm:$0xff]
        %v477 = vld [vmem:[#allocation2 + $0x8] sm:$0xff]
        %v478 = vld [vmem:[#allocation2 + $0x10] sm:$0x3]
        %v479 = vld [vmem:[#allocation2 + $0x18] sm:$0xff]
        %v480 = vld [vmem:[#allocation2 + $0x20] sm:$0xff]
        %v481 = vld [vmem:[#allocation2 + $0x28] sm:$0x3]
        %v482 = vld [vmem:[#allocation2 + $0x30] sm:$0xff]
        %v483 = vld [vmem:[#allocation2 + $0x38] sm:$0xff]
        %v484 = vld [vmem:[#allocation2 + $0x40] sm:$0x3]
        %v485 = vld [vmem:[#allocation2 + $0x48] sm:$0xff]
        %v486 = vld [vmem:[#allocation2 + $0x50] sm:$0xff]
        %v487 = vld [vmem:[#allocation2 + $0x58] sm:$0x3]
        %v488 = vld [vmem:[#allocation2 + $0x60] sm:$0xff]
        %v489 = vld [vmem:[#allocation2 + $0x68] sm:$0xff]
        %v490 = vld [vmem:[#allocation2 + $0x70] sm:$0x3]
        %v491 = vld [vmem:[#allocation2 + $0x78] sm:$0xff]
        %v492 = vld [vmem:[#allocation2 + $0x80] sm:$0xff]
        %v493 = vld [vmem:[#allocation2 + $0x88] sm:$0x3]
        %v494 = vld [vmem:[#allocation2 + $0x90] sm:$0xff]
        %v495 = vld [vmem:[#allocation2 + $0x98] sm:$0xff]
        %v496 = vld [vmem:[#allocation2 + $0xa0] sm:$0x3]
        %v497 = vld [vmem:[#allocation2 + $0xa8] sm:$0xff]
        %v498 = vld [vmem:[#allocation2 + $0xb0] sm:$0xff]
        %v499 = vld [vmem:[#allocation2 + $0xb8] sm:$0x3]
        %v500 = vld [vmem:[#allocation2 + $0xc0] sm:$0xff]
        %v501 = vld [vmem:[#allocation2 + $0xc8] sm:$0xff]
        %v502 = vld [vmem:[#allocation2 + $0xd0] sm:$0x3]
        %v503 = vld [vmem:[#allocation2 + $0xd8] sm:$0xff]
        %v504 = vld [vmem:[#allocation2 + $0xe0] sm:$0xff]
        %v505 = vld [vmem:[#allocation2 + $0xe8] sm:$0x3]
        %v506 = vlaneseq
        %v507 = vshrl.u32 %v506, 7
        %v508 = vsub.s32 0, %v507
        %v509 = vrot.slane %v396, %v508
        %v510 = vmul.f32 %v476, %v509
        %v511 = vmul.f32 %v477, %v509
        %v512 = vmul.f32 %v479, %v509
        %v513 = vmul.f32 %v480, %v509
        %v514 = vmul.f32 %v482, %v509
        %v515 = vmul.f32 %v483, %v509
        %v516 = vmul.f32 %v485, %v509
        %v517 = vmul.f32 %v486, %v509
        %v518 = vmul.f32 %v488, %v509
        %v519 = vmul.f32 %v489, %v509
        %v520 = vmul.f32 %v491, %v509
        %v521 = vmul.f32 %v492, %v509
        %v522 = vmul.f32 %v494, %v509
        %v523 = vmul.f32 %v495, %v509
        %v524 = vmul.f32 %v497, %v509
        %v525 = vmul.f32 %v498, %v509
        %v526 = vadd.f32 %v510, 0.0
        %v527 = vadd.f32 %v511, 0.0
        %v528 = vadd.f32 %v512, 0.0
        %v529 = vadd.f32 %v513, 0.0
        %v530 = vadd.f32 %v514, 0.0
        %v531 = vadd.f32 %v515, 0.0
        %v532 = vadd.f32 %v516, 0.0
        %v533 = vadd.f32 %v517, 0.0
        %v534 = vadd.f32 %v518, 0.0
        %v535 = vadd.f32 %v519, 0.0
        %v536 = vadd.f32 %v520, 0.0
        %v537 = vadd.f32 %v521, 0.0
        %v538 = vadd.f32 %v522, 0.0
        %v539 = vadd.f32 %v523, 0.0
        %v540 = vadd.f32 %v524, 0.0
        %v541 = vadd.f32 %v525, 0.0
        %v542 = vlaneseq
        %v543 = vshrl.u32 %v542, 7
        %v544 = vsub.s32 1, %v543
        %v545 = vrot.slane %v396, %v544
        %v546 = vmul.f32 %v476, %v545
        %v547 = vmul.f32 %v477, %v545
        %v548 = vmul.f32 %v478, %v545
        %v549 = vmul.f32 %v479, %v545
        %v550 = vmul.f32 %v480, %v545
        %v551 = vmul.f32 %v481, %v545
        %v552 = vmul.f32 %v482, %v545
        %v553 = vmul.f32 %v483, %v545
        %v554 = vmul.f32 %v484, %v545
        %v555 = vmul.f32 %v485, %v545
        %v556 = vmul.f32 %v486, %v545
        %v557 = vmul.f32 %v487, %v545
        %v558 = vmul.f32 %v488, %v545
        %v559 = vmul.f32 %v489, %v545
        %v560 = vmul.f32 %v490, %v545
        %v561 = vmul.f32 %v491, %v545
        %v562 = vmul.f32 %v492, %v545
        %v563 = vmul.f32 %v493, %v545
        %v564 = vmul.f32 %v494, %v545
        %v565 = vmul.f32 %v495, %v545
        %v566 = vmul.f32 %v496, %v545
        %v567 = vmul.f32 %v497, %v545
        %v568 = vmul.f32 %v498, %v545
        %v569 = vmul.f32 %v499, %v545
        %vm594 = vcmask 1046528
        %v595 = vrot.slane %v546, 1
        %v596 = vrot.slane %v547, 1
        %v597 = vsel %vm594, %v595, %v596
        %v598 = vrot.slane %v548, 1
        %v599 = vsel %vm594, %v596, %v598
        %v600 = vrot.slane %v549, 1
        %v601 = vrot.slane %v550, 1
        %v602 = vsel %vm594, %v600, %v601
        %v603 = vrot.slane %v551, 1
        %v604 = vsel %vm594, %v601, %v603
        %v605 = vrot.slane %v552, 1
        %v606 = vrot.slane %v553, 1
        %v607 = vsel %vm594, %v605, %v606
        %v608 = vrot.slane %v554, 1
        %v609 = vsel %vm594, %v606, %v608
        %v610 = vrot.slane %v555, 1
        %v611 = vrot.slane %v556, 1
        %v612 = vsel %vm594, %v610, %v611
        %v613 = vrot.slane %v557, 1
        %v614 = vsel %vm594, %v611, %v613
        %v615 = vrot.slane %v558, 1
        %v616 = vrot.slane %v559, 1
        %v617 = vsel %vm594, %v615, %v616
        %v618 = vrot.slane %v560, 1
        %v619 = vsel %vm594, %v616, %v618
        %v620 = vrot.slane %v561, 1
        %v621 = vrot.slane %v562, 1
        %v622 = vsel %vm594, %v620, %v621
        %v623 = vrot.slane %v563, 1
        %v624 = vsel %vm594, %v621, %v623
        %v625 = vrot.slane %v564, 1
        %v626 = vrot.slane %v565, 1
        %v627 = vsel %vm594, %v625, %v626
        %v628 = vrot.slane %v566, 1
        %v629 = vsel %vm594, %v626, %v628
        %v630 = vrot.slane %v567, 1
        %v631 = vrot.slane %v568, 1
        %v632 = vsel %vm594, %v630, %v631
        %v633 = vrot.slane %v569, 1
        %v634 = vsel %vm594, %v631, %v633
        %v651 = vadd.f32 %v526, %v597
        %v652 = vadd.f32 %v527, %v599
        %v653 = vadd.f32 %v528, %v602
        %v654 = vadd.f32 %v529, %v604
        %v655 = vadd.f32 %v530, %v607
        %v656 = vadd.f32 %v531, %v609
        %v657 = vadd.f32 %v532, %v612
        %v658 = vadd.f32 %v533, %v614
        %v659 = vadd.f32 %v534, %v617
        %v660 = vadd.f32 %v535, %v619
        %v661 = vadd.f32 %v536, %v622
        %v662 = vadd.f32 %v537, %v624
        %v663 = vadd.f32 %v538, %v627
        %v664 = vadd.f32 %v539, %v629
        %v665 = vadd.f32 %v540, %v632
        %v666 = vadd.f32 %v541, %v634
        %v667 = vlaneseq
        %v668 = vshrl.u32 %v667, 7
        %v669 = vsub.s32 2, %v668
        %v670 = vrot.slane %v396, %v669
        %v671 = vmul.f32 %v476, %v670
        %v672 = vmul.f32 %v477, %v670
        %v673 = vmul.f32 %v478, %v670
        %v674 = vmul.f32 %v479, %v670
        %v675 = vmul.f32 %v480, %v670
        %v676 = vmul.f32 %v481, %v670
        %v677 = vmul.f32 %v482, %v670
        %v678 = vmul.f32 %v483, %v670
        %v679 = vmul.f32 %v484, %v670
        %v680 = vmul.f32 %v485, %v670
        %v681 = vmul.f32 %v486, %v670
        %v682 = vmul.f32 %v487, %v670
        %v683 = vmul.f32 %v488, %v670
        %v684 = vmul.f32 %v489, %v670
        %v685 = vmul.f32 %v490, %v670
        %v686 = vmul.f32 %v491, %v670
        %v687 = vmul.f32 %v492, %v670
        %v688 = vmul.f32 %v493, %v670
        %v689 = vmul.f32 %v494, %v670
        %v690 = vmul.f32 %v495, %v670
        %v691 = vmul.f32 %v496, %v670
        %v692 = vmul.f32 %v497, %v670
        %v693 = vmul.f32 %v498, %v670
        %v694 = vmul.f32 %v499, %v670
        %vm719 = vcmask 1045504
        %v720 = vrot.slane %v671, 2
        %v721 = vrot.slane %v672, 2
        %v722 = vsel %vm719, %v720, %v721
        %v723 = vrot.slane %v673, 2
        %v724 = vsel %vm719, %v721, %v723
        %v725 = vrot.slane %v674, 2
        %v726 = vrot.slane %v675, 2
        %v727 = vsel %vm719, %v725, %v726
        %v728 = vrot.slane %v676, 2
        %v729 = vsel %vm719, %v726, %v728
        %v730 = vrot.slane %v677, 2
        %v731 = vrot.slane %v678, 2
        %v732 = vsel %vm719, %v730, %v731
        %v733 = vrot.slane %v679, 2
        %v734 = vsel %vm719, %v731, %v733
        %v735 = vrot.slane %v680, 2
        %v736 = vrot.slane %v681, 2
        %v737 = vsel %vm719, %v735, %v736
        %v738 = vrot.slane %v682, 2
        %v739 = vsel %vm719, %v736, %v738
        %v740 = vrot.slane %v683, 2
        %v741 = vrot.slane %v684, 2
        %v742 = vsel %vm719, %v740, %v741
        %v743 = vrot.slane %v685, 2
        %v744 = vsel %vm719, %v741, %v743
        %v745 = vrot.slane %v686, 2
        %v746 = vrot.slane %v687, 2
        %v747 = vsel %vm719, %v745, %v746
        %v748 = vrot.slane %v688, 2
        %v749 = vsel %vm719, %v746, %v748
        %v750 = vrot.slane %v689, 2
        %v751 = vrot.slane %v690, 2
        %v752 = vsel %vm719, %v750, %v751
        %v753 = vrot.slane %v691, 2
        %v754 = vsel %vm719, %v751, %v753
        %v755 = vrot.slane %v692, 2
        %v756 = vrot.slane %v693, 2
        %v757 = vsel %vm719, %v755, %v756
        %v758 = vrot.slane %v694, 2
        %v759 = vsel %vm719, %v756, %v758
        %v776 = vadd.f32 %v651, %v722
        %v777 = vadd.f32 %v652, %v724
        %v778 = vadd.f32 %v653, %v727
        %v779 = vadd.f32 %v654, %v729
        %v780 = vadd.f32 %v655, %v732
        %v781 = vadd.f32 %v656, %v734
        %v782 = vadd.f32 %v657, %v737
        %v783 = vadd.f32 %v658, %v739
        %v784 = vadd.f32 %v659, %v742
        %v785 = vadd.f32 %v660, %v744
        %v786 = vadd.f32 %v661, %v747
        %v787 = vadd.f32 %v662, %v749
        %v788 = vadd.f32 %v663, %v752
        %v789 = vadd.f32 %v664, %v754
        %v790 = vadd.f32 %v665, %v757
        %v791 = vadd.f32 %v666, %v759
        %v792 = vlaneseq
        %v793 = vshrl.u32 %v792, 7
        %v794 = vsub.s32 0, %v793
        %v795 = vrot.slane %v397, %v794
        %v796 = vmul.f32 %v479, %v795
        %v797 = vmul.f32 %v480, %v795
        %v798 = vmul.f32 %v482, %v795
        %v799 = vmul.f32 %v483, %v795
        %v800 = vmul.f32 %v485, %v795
        %v801 = vmul.f32 %v486, %v795
        %v802 = vmul.f32 %v488, %v795
        %v803 = vmul.f32 %v489, %v795
        %v804 = vmul.f32 %v491, %v795
        %v805 = vmul.f32 %v492, %v795
        %v806 = vmul.f32 %v494, %v795
        %v807 = vmul.f32 %v495, %v795
        %v808 = vmul.f32 %v497, %v795
        %v809 = vmul.f32 %v498, %v795
        %v810 = vmul.f32 %v500, %v795
        %v811 = vmul.f32 %v501, %v795
        %v812 = vadd.f32 %v776, %v796
        %v813 = vadd.f32 %v777, %v797
        %v814 = vadd.f32 %v778, %v798
        %v815 = vadd.f32 %v779, %v799
        %v816 = vadd.f32 %v780, %v800
        %v817 = vadd.f32 %v781, %v801
        %v818 = vadd.f32 %v782, %v802
        %v819 = vadd.f32 %v783, %v803
        %v820 = vadd.f32 %v784, %v804
        %v821 = vadd.f32 %v785, %v805
        %v822 = vadd.f32 %v786, %v806
        %v823 = vadd.f32 %v787, %v807
        %v824 = vadd.f32 %v788, %v808
        %v825 = vadd.f32 %v789, %v809
        %v826 = vadd.f32 %v790, %v810
        %v827 = vadd.f32 %v791, %v811
        %v828 = vlaneseq
        %v829 = vshrl.u32 %v828, 7
        %v830 = vsub.s32 1, %v829
        %v831 = vrot.slane %v397, %v830
        %v832 = vmul.f32 %v479, %v831
        %v833 = vmul.f32 %v480, %v831
        %v834 = vmul.f32 %v481, %v831
        %v835 = vmul.f32 %v482, %v831
        %v836 = vmul.f32 %v483, %v831
        %v837 = vmul.f32 %v484, %v831
        %v838 = vmul.f32 %v485, %v831
        %v839 = vmul.f32 %v486, %v831
        %v840 = vmul.f32 %v487, %v831
        %v841 = vmul.f32 %v488, %v831
        %v842 = vmul.f32 %v489, %v831
        %v843 = vmul.f32 %v490, %v831
        %v844 = vmul.f32 %v491, %v831
        %v845 = vmul.f32 %v492, %v831
        %v846 = vmul.f32 %v493, %v831
        %v847 = vmul.f32 %v494, %v831
        %v848 = vmul.f32 %v495, %v831
        %v849 = vmul.f32 %v496, %v831
        %v850 = vmul.f32 %v497, %v831
        %v851 = vmul.f32 %v498, %v831
        %v852 = vmul.f32 %v499, %v831
        %v853 = vmul.f32 %v500, %v831
        %v854 = vmul.f32 %v501, %v831
        %v855 = vmul.f32 %v502, %v831
        %v880 = vrot.slane %v832, 1
        %v881 = vrot.slane %v833, 1
        %v882 = vsel %vm594, %v880, %v881
        %v883 = vrot.slane %v834, 1
        %v884 = vsel %vm594, %v881, %v883
        %v885 = vrot.slane %v835, 1
        %v886 = vrot.slane %v836, 1
        %v887 = vsel %vm594, %v885, %v886
        %v888 = vrot.slane %v837, 1
        %v889 = vsel %vm594, %v886, %v888
        %v890 = vrot.slane %v838, 1
        %v891 = vrot.slane %v839, 1
        %v892 = vsel %vm594, %v890, %v891
        %v893 = vrot.slane %v840, 1
        %v894 = vsel %vm594, %v891, %v893
        %v895 = vrot.slane %v841, 1
        %v896 = vrot.slane %v842, 1
        %v897 = vsel %vm594, %v895, %v896
        %v898 = vrot.slane %v843, 1
        %v899 = vsel %vm594, %v896, %v898
        %v900 = vrot.slane %v844, 1
        %v901 = vrot.slane %v845, 1
        %v902 = vsel %vm594, %v900, %v901
        %v903 = vrot.slane %v846, 1
        %v904 = vsel %vm594, %v901, %v903
        %v905 = vrot.slane %v847, 1
        %v906 = vrot.slane %v848, 1
        %v907 = vsel %vm594, %v905, %v906
        %v908 = vrot.slane %v849, 1
        %v909 = vsel %vm594, %v906, %v908
        %v910 = vrot.slane %v850, 1
        %v911 = vrot.slane %v851, 1
        %v912 = vsel %vm594, %v910, %v911
        %v913 = vrot.slane %v852, 1
        %v914 = vsel %vm594, %v911, %v913
        %v915 = vrot.slane %v853, 1
        %v916 = vrot.slane %v854, 1
        %v917 = vsel %vm594, %v915, %v916
        %v918 = vrot.slane %v855, 1
        %v919 = vsel %vm594, %v916, %v918
        %v936 = vadd.f32 %v812, %v882
        %v937 = vadd.f32 %v813, %v884
        %v938 = vadd.f32 %v814, %v887
        %v939 = vadd.f32 %v815, %v889
        %v940 = vadd.f32 %v816, %v892
        %v941 = vadd.f32 %v817, %v894
        %v942 = vadd.f32 %v818, %v897
        %v943 = vadd.f32 %v819, %v899
        %v944 = vadd.f32 %v820, %v902
        %v945 = vadd.f32 %v821, %v904
        %v946 = vadd.f32 %v822, %v907
        %v947 = vadd.f32 %v823, %v909
        %v948 = vadd.f32 %v824, %v912
        %v949 = vadd.f32 %v825, %v914
        %v950 = vadd.f32 %v826, %v917
        %v951 = vadd.f32 %v827, %v919
        %v952 = vlaneseq
        %v953 = vshrl.u32 %v952, 7
        %v954 = vsub.s32 2, %v953
        %v955 = vrot.slane %v397, %v954
        %v956 = vmul.f32 %v479, %v955
        %v957 = vmul.f32 %v480, %v955
        %v958 = vmul.f32 %v481, %v955
        %v959 = vmul.f32 %v482, %v955
        %v960 = vmul.f32 %v483, %v955
        %v961 = vmul.f32 %v484, %v955
        %v962 = vmul.f32 %v485, %v955
        %v963 = vmul.f32 %v486, %v955
        %v964 = vmul.f32 %v487, %v955
        %v965 = vmul.f32 %v488, %v955
        %v966 = vmul.f32 %v489, %v955
        %v967 = vmul.f32 %v490, %v955
        %v968 = vmul.f32 %v491, %v955
        %v969 = vmul.f32 %v492, %v955
        %v970 = vmul.f32 %v493, %v955
        %v971 = vmul.f32 %v494, %v955
        %v972 = vmul.f32 %v495, %v955
        %v973 = vmul.f32 %v496, %v955
        %v974 = vmul.f32 %v497, %v955
        %v975 = vmul.f32 %v498, %v955
        %v976 = vmul.f32 %v499, %v955
        %v977 = vmul.f32 %v500, %v955
        %v978 = vmul.f32 %v501, %v955
        %v979 = vmul.f32 %v502, %v955
        %v1004 = vrot.slane %v956, 2
        %v1005 = vrot.slane %v957, 2
        %v1006 = vsel %vm719, %v1004, %v1005
        %v1007 = vrot.slane %v958, 2
        %v1008 = vsel %vm719, %v1005, %v1007
        %v1009 = vrot.slane %v959, 2
        %v1010 = vrot.slane %v960, 2
        %v1011 = vsel %vm719, %v1009, %v1010
        %v1012 = vrot.slane %v961, 2
        %v1013 = vsel %vm719, %v1010, %v1012
        %v1014 = vrot.slane %v962, 2
        %v1015 = vrot.slane %v963, 2
        %v1016 = vsel %vm719, %v1014, %v1015
        %v1017 = vrot.slane %v964, 2
        %v1018 = vsel %vm719, %v1015, %v1017
        %v1019 = vrot.slane %v965, 2
        %v1020 = vrot.slane %v966, 2
        %v1021 = vsel %vm719, %v1019, %v1020
        %v1022 = vrot.slane %v967, 2
        %v1023 = vsel %vm719, %v1020, %v1022
        %v1024 = vrot.slane %v968, 2
        %v1025 = vrot.slane %v969, 2
        %v1026 = vsel %vm719, %v1024, %v1025
        %v1027 = vrot.slane %v970, 2
        %v1028 = vsel %vm719, %v1025, %v1027
        %v1029 = vrot.slane %v971, 2
        %v1030 = vrot.slane %v972, 2
        %v1031 = vsel %vm719, %v1029, %v1030
        %v1032 = vrot.slane %v973, 2
        %v1033 = vsel %vm719, %v1030, %v1032
        %v1034 = vrot.slane %v974, 2
        %v1035 = vrot.slane %v975, 2
        %v1036 = vsel %vm719, %v1034, %v1035
        %v1037 = vrot.slane %v976, 2
        %v1038 = vsel %vm719, %v1035, %v1037
        %v1039 = vrot.slane %v977, 2
        %v1040 = vrot.slane %v978, 2
        %v1041 = vsel %vm719, %v1039, %v1040
        %v1042 = vrot.slane %v979, 2
        %v1043 = vsel %vm719, %v1040, %v1042
        %v1060 = vadd.f32 %v936, %v1006
        %v1061 = vadd.f32 %v937, %v1008
        %v1062 = vadd.f32 %v938, %v1011
        %v1063 = vadd.f32 %v939, %v1013
        %v1064 = vadd.f32 %v940, %v1016
        %v1065 = vadd.f32 %v941, %v1018
        %v1066 = vadd.f32 %v942, %v1021
        %v1067 = vadd.f32 %v943, %v1023
        %v1068 = vadd.f32 %v944, %v1026
        %v1069 = vadd.f32 %v945, %v1028
        %v1070 = vadd.f32 %v946, %v1031
        %v1071 = vadd.f32 %v947, %v1033
        %v1072 = vadd.f32 %v948, %v1036
        %v1073 = vadd.f32 %v949, %v1038
        %v1074 = vadd.f32 %v950, %v1041
        %v1075 = vadd.f32 %v951, %v1043
        %v1076 = vlaneseq
        %v1077 = vshrl.u32 %v1076, 7
        %v1078 = vsub.s32 0, %v1077
        %v1079 = vrot.slane %v398, %v1078
        %v1080 = vmul.f32 %v482, %v1079
        %v1081 = vmul.f32 %v483, %v1079
        %v1082 = vmul.f32 %v485, %v1079
        %v1083 = vmul.f32 %v486, %v1079
        %v1084 = vmul.f32 %v488, %v1079
        %v1085 = vmul.f32 %v489, %v1079
        %v1086 = vmul.f32 %v491, %v1079
        %v1087 = vmul.f32 %v492, %v1079
        %v1088 = vmul.f32 %v494, %v1079
        %v1089 = vmul.f32 %v495, %v1079
        %v1090 = vmul.f32 %v497, %v1079
        %v1091 = vmul.f32 %v498, %v1079
        %v1092 = vmul.f32 %v500, %v1079
        %v1093 = vmul.f32 %v501, %v1079
        %v1094 = vmul.f32 %v503, %v1079
        %v1095 = vmul.f32 %v504, %v1079
        %v1096 = vadd.f32 %v1060, %v1080
        %v1097 = vadd.f32 %v1061, %v1081
        %v1098 = vadd.f32 %v1062, %v1082
        %v1099 = vadd.f32 %v1063, %v1083
        %v1100 = vadd.f32 %v1064, %v1084
        %v1101 = vadd.f32 %v1065, %v1085
        %v1102 = vadd.f32 %v1066, %v1086
        %v1103 = vadd.f32 %v1067, %v1087
        %v1104 = vadd.f32 %v1068, %v1088
        %v1105 = vadd.f32 %v1069, %v1089
        %v1106 = vadd.f32 %v1070, %v1090
        %v1107 = vadd.f32 %v1071, %v1091
        %v1108 = vadd.f32 %v1072, %v1092
        %v1109 = vadd.f32 %v1073, %v1093
        %v1110 = vadd.f32 %v1074, %v1094
        %v1111 = vadd.f32 %v1075, %v1095
        %v1112 = vlaneseq
        %v1113 = vshrl.u32 %v1112, 7
        %v1114 = vsub.s32 1, %v1113
        %v1115 = vrot.slane %v398, %v1114
        %v1116 = vmul.f32 %v482, %v1115
        %v1117 = vmul.f32 %v483, %v1115
        %v1118 = vmul.f32 %v484, %v1115
        %v1119 = vmul.f32 %v485, %v1115
        %v1120 = vmul.f32 %v486, %v1115
        %v1121 = vmul.f32 %v487, %v1115
        %v1122 = vmul.f32 %v488, %v1115
        %v1123 = vmul.f32 %v489, %v1115
        %v1124 = vmul.f32 %v490, %v1115
        %v1125 = vmul.f32 %v491, %v1115
        %v1126 = vmul.f32 %v492, %v1115
        %v1127 = vmul.f32 %v493, %v1115
        %v1128 = vmul.f32 %v494, %v1115
        %v1129 = vmul.f32 %v495, %v1115
        %v1130 = vmul.f32 %v496, %v1115
        %v1131 = vmul.f32 %v497, %v1115
        %v1132 = vmul.f32 %v498, %v1115
        %v1133 = vmul.f32 %v499, %v1115
        %v1134 = vmul.f32 %v500, %v1115
        %v1135 = vmul.f32 %v501, %v1115
        %v1136 = vmul.f32 %v502, %v1115
        %v1137 = vmul.f32 %v503, %v1115
        %v1138 = vmul.f32 %v504, %v1115
        %v1139 = vmul.f32 %v505, %v1115
        %v1164 = vrot.slane %v1116, 1
        %v1165 = vrot.slane %v1117, 1
        %v1166 = vsel %vm594, %v1164, %v1165
        %v1167 = vrot.slane %v1118, 1
        %v1168 = vsel %vm594, %v1165, %v1167
        %v1169 = vrot.slane %v1119, 1
        %v1170 = vrot.slane %v1120, 1
        %v1171 = vsel %vm594, %v1169, %v1170
        %v1172 = vrot.slane %v1121, 1
        %v1173 = vsel %vm594, %v1170, %v1172
        %v1174 = vrot.slane %v1122, 1
        %v1175 = vrot.slane %v1123, 1
        %v1176 = vsel %vm594, %v1174, %v1175
        %v1177 = vrot.slane %v1124, 1
        %v1178 = vsel %vm594, %v1175, %v1177
        %v1179 = vrot.slane %v1125, 1
        %v1180 = vrot.slane %v1126, 1
        %v1181 = vsel %vm594, %v1179, %v1180
        %v1182 = vrot.slane %v1127, 1
        %v1183 = vsel %vm594, %v1180, %v1182
        %v1184 = vrot.slane %v1128, 1
        %v1185 = vrot.slane %v1129, 1
        %v1186 = vsel %vm594, %v1184, %v1185
        %v1187 = vrot.slane %v1130, 1
        %v1188 = vsel %vm594, %v1185, %v1187
        %v1189 = vrot.slane %v1131, 1
        %v1190 = vrot.slane %v1132, 1
        %v1191 = vsel %vm594, %v1189, %v1190
        %v1192 = vrot.slane %v1133, 1
        %v1193 = vsel %vm594, %v1190, %v1192
        %v1194 = vrot.slane %v1134, 1
        %v1195 = vrot.slane %v1135, 1
        %v1196 = vsel %vm594, %v1194, %v1195
        %v1197 = vrot.slane %v1136, 1
        %v1198 = vsel %vm594, %v1195, %v1197
        %v1199 = vrot.slane %v1137, 1
        %v1200 = vrot.slane %v1138, 1
        %v1201 = vsel %vm594, %v1199, %v1200
        %v1202 = vrot.slane %v1139, 1
        %v1203 = vsel %vm594, %v1200, %v1202
        %v1220 = vadd.f32 %v1096, %v1166
        %v1221 = vadd.f32 %v1097, %v1168
        %v1222 = vadd.f32 %v1098, %v1171
        %v1223 = vadd.f32 %v1099, %v1173
        %v1224 = vadd.f32 %v1100, %v1176
        %v1225 = vadd.f32 %v1101, %v1178
        %v1226 = vadd.f32 %v1102, %v1181
        %v1227 = vadd.f32 %v1103, %v1183
        %v1228 = vadd.f32 %v1104, %v1186
        %v1229 = vadd.f32 %v1105, %v1188
        %v1230 = vadd.f32 %v1106, %v1191
        %v1231 = vadd.f32 %v1107, %v1193
        %v1232 = vadd.f32 %v1108, %v1196
        %v1233 = vadd.f32 %v1109, %v1198
        %v1234 = vadd.f32 %v1110, %v1201
        %v1235 = vadd.f32 %v1111, %v1203
        %v1236 = vlaneseq
        %v1237 = vshrl.u32 %v1236, 7
        %v1238 = vsub.s32 2, %v1237
        %v1239 = vrot.slane %v398, %v1238
        %v1240 = vmul.f32 %v482, %v1239
        %v1241 = vmul.f32 %v483, %v1239
        %v1242 = vmul.f32 %v484, %v1239
        %v1243 = vmul.f32 %v485, %v1239
        %v1244 = vmul.f32 %v486, %v1239
        %v1245 = vmul.f32 %v487, %v1239
        %v1246 = vmul.f32 %v488, %v1239
        %v1247 = vmul.f32 %v489, %v1239
        %v1248 = vmul.f32 %v490, %v1239
        %v1249 = vmul.f32 %v491, %v1239
        %v1250 = vmul.f32 %v492, %v1239
        %v1251 = vmul.f32 %v493, %v1239
        %v1252 = vmul.f32 %v494, %v1239
        %v1253 = vmul.f32 %v495, %v1239
        %v1254 = vmul.f32 %v496, %v1239
        %v1255 = vmul.f32 %v497, %v1239
        %v1256 = vmul.f32 %v498, %v1239
        %v1257 = vmul.f32 %v499, %v1239
        %v1258 = vmul.f32 %v500, %v1239
        %v1259 = vmul.f32 %v501, %v1239
        %v1260 = vmul.f32 %v502, %v1239
        %v1261 = vmul.f32 %v503, %v1239
        %v1262 = vmul.f32 %v504, %v1239
        %v1263 = vmul.f32 %v505, %v1239
        %v1288 = vrot.slane %v1240, 2
        %v1289 = vrot.slane %v1241, 2
        %v1290 = vsel %vm719, %v1288, %v1289
        %v1291 = vrot.slane %v1242, 2
        %v1292 = vsel %vm719, %v1289, %v1291
        %v1293 = vrot.slane %v1243, 2
        %v1294 = vrot.slane %v1244, 2
        %v1295 = vsel %vm719, %v1293, %v1294
        %v1296 = vrot.slane %v1245, 2
        %v1297 = vsel %vm719, %v1294, %v1296
        %v1298 = vrot.slane %v1246, 2
        %v1299 = vrot.slane %v1247, 2
        %v1300 = vsel %vm719, %v1298, %v1299
        %v1301 = vrot.slane %v1248, 2
        %v1302 = vsel %vm719, %v1299, %v1301
        %v1303 = vrot.slane %v1249, 2
        %v1304 = vrot.slane %v1250, 2
        %v1305 = vsel %vm719, %v1303, %v1304
        %v1306 = vrot.slane %v1251, 2
        %v1307 = vsel %vm719, %v1304, %v1306
        %v1308 = vrot.slane %v1252, 2
        %v1309 = vrot.slane %v1253, 2
        %v1310 = vsel %vm719, %v1308, %v1309
        %v1311 = vrot.slane %v1254, 2
        %v1312 = vsel %vm719, %v1309, %v1311
        %v1313 = vrot.slane %v1255, 2
        %v1314 = vrot.slane %v1256, 2
        %v1315 = vsel %vm719, %v1313, %v1314
        %v1316 = vrot.slane %v1257, 2
        %v1317 = vsel %vm719, %v1314, %v1316
        %v1318 = vrot.slane %v1258, 2
        %v1319 = vrot.slane %v1259, 2
        %v1320 = vsel %vm719, %v1318, %v1319
        %v1321 = vrot.slane %v1260, 2
        %v1322 = vsel %vm719, %v1319, %v1321
        %v1323 = vrot.slane %v1261, 2
        %v1324 = vrot.slane %v1262, 2
        %v1325 = vsel %vm719, %v1323, %v1324
        %v1326 = vrot.slane %v1263, 2
        %v1327 = vsel %vm719, %v1324, %v1326
        %v1344 = vadd.f32 %v1220, %v1290
        %v1345 = vadd.f32 %v1221, %v1292
        %v1346 = vadd.f32 %v1222, %v1295
        %v1347 = vadd.f32 %v1223, %v1297
        %v1348 = vadd.f32 %v1224, %v1300
        %v1349 = vadd.f32 %v1225, %v1302
        %v1350 = vadd.f32 %v1226, %v1305
        %v1351 = vadd.f32 %v1227, %v1307
        %v1352 = vadd.f32 %v1228, %v1310
        %v1353 = vadd.f32 %v1229, %v1312
        %v1354 = vadd.f32 %v1230, %v1315
        %v1355 = vadd.f32 %v1231, %v1317
        %v1356 = vadd.f32 %v1232, %v1320
        %v1357 = vadd.f32 %v1233, %v1322
        %v1358 = vadd.f32 %v1234, %v1325
        %v1359 = vadd.f32 %v1235, %v1327
        %v1361 = vlaneseq
        %v1362 = vshrl.u32 %v1361, 7
        %v1363 = vsub.s32 0, %v1362
        %v1364 = vrot.slane %v399, %v1363
        %v1366 = vadd.f32 %v1344, %v1364
        %v1367 = vadd.f32 %v1345, %v1364
        %v1368 = vadd.f32 %v1346, %v1364
        %v1369 = vadd.f32 %v1347, %v1364
        %v1370 = vadd.f32 %v1348, %v1364
        %v1371 = vadd.f32 %v1349, %v1364
        %v1372 = vadd.f32 %v1350, %v1364
        %v1373 = vadd.f32 %v1351, %v1364
        %v1374 = vadd.f32 %v1352, %v1364
        %v1375 = vadd.f32 %v1353, %v1364
        %v1376 = vadd.f32 %v1354, %v1364
        %v1377 = vadd.f32 %v1355, %v1364
        %v1378 = vadd.f32 %v1356, %v1364
        %v1379 = vadd.f32 %v1357, %v1364
        %v1380 = vadd.f32 %v1358, %v1364
        %v1381 = vadd.f32 %v1359, %v1364
        %1382 = vst.msk [vmem:[%s385] sm:$0xff] %vm437, %v1366
        %1383 = vst.msk [vmem:[%s385 + $0x8] sm:$0xff] %vm437, %v1367
        %1384 = vst.msk [vmem:[%s385 + $0x10] sm:$0xff] %vm437, %v1368
        %1385 = vst.msk [vmem:[%s385 + $0x18] sm:$0xff] %vm437, %v1369
        %1386 = vst.msk [vmem:[%s385 + $0x20] sm:$0xff] %vm437, %v1370
        %1387 = vst.msk [vmem:[%s385 + $0x28] sm:$0xff] %vm437, %v1371
        %1388 = vst.msk [vmem:[%s385 + $0x30] sm:$0xff] %vm437, %v1372
        %1389 = vst.msk [vmem:[%s385 + $0x38] sm:$0xff] %vm437, %v1373
        %1390 = vst.msk [vmem:[%s385 + $0x40] sm:$0xff] %vm437, %v1374
        %1391 = vst.msk [vmem:[%s385 + $0x48] sm:$0xff] %vm437, %v1375
        %1392 = vst.msk [vmem:[%s385 + $0x50] sm:$0xff] %vm437, %v1376
        %1393 = vst.msk [vmem:[%s385 + $0x58] sm:$0xff] %vm437, %v1377
        %1394 = vst.msk [vmem:[%s385 + $0x60] sm:$0xff] %vm437, %v1378
        %1395 = vst.msk [vmem:[%s385 + $0x68] sm:$0xff] %vm437, %v1379
        %1396 = vst.msk [vmem:[%s385 + $0x70] sm:$0xff] %vm437, %v1380
        %1397 = vst.msk [vmem:[%s385 + $0x78] sm:$0xff] %vm437, %v1381
        %s1398 = sand.u32 %s190, 1
        %s1399 = scalar_lea.sflag [#allocation5], %s1398
        %s1400 = sand.u32 %s190, 1
        %s1401 = smul.addr %s1400, 128
        %s1402 = scalar_lea.vmem [#allocation11], %s1401
        // Predicated region
        $region57: #{tpu_custom_call.1} parent=39 // pred_check
          %p1403 = pneg %p200
        $region58: #{tpu_custom_call.1} parent=39 // pred_check_branch
          %1405 = sbr.rel (%p1403) target = $region60
        $region59: #{tpu_custom_call.1} parent=39 // pred_region
          %s1406 = smul.u32 8, %s31
          %s1408 = ssub.s32 2048, 2048
          %1409 = vsyncadd %s1399, %s1408
          %s1410 = smul.addr %s1406, 2
          %s1411 = smul.addr %s30, 32
          %s1412 = sadd.s32 %s1410, %s1411
          %s1413 = smul.addr %s1412, 128
          %s1414 = scalar_lea.hbm %s5, %s1413
          %s1415 = sshll.u32 %s1402, 4
          %s1416 = int_to_ptr.vmem [resolvable:$true] %s1415
          %1421 = dma.vmem_to_hbm [thread:$0]  %s1416, 2048, %s1414, %s1399, 128, 128, 8
        $region60: #{tpu_custom_call.1} parent=39 // pred_fallthru
          _
      $region40: #{tpu_custom_call.1} parent=5 // pred_fallthru
        _
      %p1422 = scmp.le.s32.totalorder 2, %s21
      // Predicated region
      $region61: #{tpu_custom_call.1} parent=5 // pred_check
        %p1423 = pneg %p1422
      $region62: #{tpu_custom_call.1} parent=5 // pred_check_branch
        %1425 = sbr.rel (%p1423) target = $region64
      $region63: #{tpu_custom_call.1} parent=5 // pred_region
        %s1426 = ssub.s32 %s21, 2
        // Predicated region
        $region65: #{tpu_custom_call.1} parent=63 // pred_check
          %p1427 = pneg %p206
        $region66: #{tpu_custom_call.1} parent=63 // pred_check_branch
          %1429 = sbr.rel (%p1427) target = $region68
        $region67: #{tpu_custom_call.1} parent=63 // pred_region
          %s1430 = sand.u32 %s191, 1
          %s1431 = scalar_lea.sflag [#allocation5], %s1430
          %s1432 = sand.u32 %s191, 1
          %s1433 = smul.addr %s1432, 128
          %s1434 = scalar_lea.vmem [#allocation11], %s1433
          %1435 = dma.done %s1431, 2048
        $region68: #{tpu_custom_call.1} parent=63 // pred_fallthru
          _
      $region64: #{tpu_custom_call.1} parent=5 // pred_fallthru
        _
    $region6: #{tpu_custom_call.1} parent=1 // loop_footer
      %s25 = sadd.s32 1, %s21
    $region7: #{tpu_custom_call.1} parent=1 // loop_footer_branch
      %20 = sbr.rel target = $region3
    $region8: #{tpu_custom_call.1} parent=1 // loop_exit
      _
    %1436 = vsyncpa [#allocation4], 1
    %s1437 = scalar_lea.sflag [#allocation4], 1
    %1438 = vsyncpa %s1437, 1
    %1439 = vsyncpa [#allocation7], 1
    %s1440 = scalar_lea.sflag [#allocation7], 1
    %1441 = vsyncpa %s1440, 1
    %1442 = vsyncpa [#allocation10], 1
    %1443 = vsyncpa [#allocation5], 1
    %s1444 = scalar_lea.sflag [#allocation5], 1
    %1445 = vsyncpa %s1444, 1

</llo_original>
